<compile_context>
chip_gen: v7x
topology: tpu7x:2x2x1
jax: 0.10.0
libtpu: 0.0.40
codegen_flags: <defaults>
</compile_context>

<pallas_src>
import functools

import jax
import jax.numpy as jnp
from jax.experimental import pallas as pl
from jax.experimental.pallas import tpu as pltpu


def _round_up(v, m):
    return ((v + m - 1) // m) * m


def _mlp_kernel(x_ref, w1_ref, b1_ref, w2_ref, b2_ref, o_ref):
    x = x_ref[...]          # (TN, F)  f32
    w1 = w1_ref[...]        # (F, H)   f32
    f = x.shape[1]

    if f <= 8:
        # Tiny contraction dim: broadcasted VPU FMAs, no MXU pass / layout
        # shuffle for a K=2 matmul.  Loop is static (trace-time unrolled).
        h = b1_ref[...]                                 # (1, H) broadcasts
        for k in range(f):
            h = h + x[:, k:k + 1] * w1[k:k + 1, :]       # (TN,1)*(1,H) -> (TN,H)
    else:
        h = jnp.dot(x, w1, preferred_element_type=jnp.float32) + b1_ref[...]

    h = jnp.maximum(h, 0.0)                              # ReLU, f32

    # Second layer on the MXU, f32 accumulate.
    y = jnp.dot(h, w2_ref[...], preferred_element_type=jnp.float32)
    o_ref[...] = (y + b2_ref[...]).astype(o_ref.dtype)


def _choose_tiling(n):
    """Pick (block_n, n_pad). Single grid step for small N; 512-row tiles
    (>=2 steps, megacore-shardable on v7x) for large N."""
    n8 = _round_up(max(n, 8), 8)
    if n8 <= 1024:
        return n8, n8
    bn = 512
    return bn, _round_up(n8, bn)


@jax.jit
def net_forward(x, w1, b1, w2, b2):
    """x: (N, F) f32; w1: (F, H); b1: (H,); w2: (H, O); b2: (O,) -> (N, O) f32."""
    n, f = x.shape
    h = w1.shape[1]
    o = w2.shape[1]

    block_n, n_pad = _choose_tiling(n)

    # Biases as (1, dim) rows (free reshape); no lane padding, no dtype casts.
    b1_2d = b1.reshape(1, h).astype(jnp.float32)
    b2_2d = b2.reshape(1, o).astype(jnp.float32)

    # Pad batch rows only if needed (no-op for the tutorial shapes).
    if n_pad != n:
        x_in = jnp.zeros((n_pad, f), jnp.float32).at[:n, :].set(x)
    else:
        x_in = x

    grid = (n_pad // block_n,)

    flops = 2 * n_pad * (f * h + h * o)
    bytes_accessed = 4 * (n_pad * f + f * h + h + h * o + o + n_pad * o)

    out = pl.pallas_call(
        _mlp_kernel,
        out_shape=jax.ShapeDtypeStruct((n_pad, o), jnp.float32),
        grid_spec=pltpu.PrefetchScalarGridSpec(
            num_scalar_prefetch=0,
            grid=grid,
            in_specs=[
                pl.BlockSpec((block_n, f), lambda i: (i, 0)),   # x tile
                pl.BlockSpec((f, h), lambda i: (0, 0)),          # W1 (resident)
                pl.BlockSpec((1, h), lambda i: (0, 0)),          # b1 (resident)
                pl.BlockSpec((h, o), lambda i: (0, 0)),          # W2 (resident)
                pl.BlockSpec((1, o), lambda i: (0, 0)),          # b2 (resident)
            ],
            out_specs=pl.BlockSpec((block_n, o), lambda i: (i, 0)),
        ),
        compiler_params=pltpu.CompilerParams(
            # Megacore-shardable on v7x when the grid has >=2 steps (large N).
            dimension_semantics=("parallel",),
            # Per-tile footprint is ~1-2 MiB even at block_n=1024; this limit
            # is valid on v5e (16 MiB scoped default) through v7x (64 MiB).
            vmem_limit_bytes=32 * 1024 * 1024,
        ),
        cost_estimate=pl.CostEstimate(
            flops=flops, transcendentals=0, bytes_accessed=bytes_accessed),
    )(x_in, w1.astype(jnp.float32), b1_2d, w2.astype(jnp.float32), b2_2d)

    if n_pad != n:
        out = out[:n, :]
    return out


def init_linear(key, fan_in, fan_out):
    """PyTorch nn.Linear default init: U(-1/sqrt(fan_in), 1/sqrt(fan_in))."""
    kw, kb = jax.random.split(key)
    bound = 1.0 / jnp.sqrt(jnp.float32(fan_in))
    # PyTorch stores weight as (out, in); we keep (in, out) for row-major matmul.
    w = jax.random.uniform(kw, (fan_in, fan_out), jnp.float32, -bound, bound)
    b = jax.random.uniform(kb, (fan_out,), jnp.float32, -bound, bound)
    return w, b


if __name__ == "__main__":
    # Tutorial shapes: 100 + 100 samples, 2 input features, 2 classes.
    n_per_class, n_feature, n_hidden, n_output = 100, 2, 32, 2
    batch = 2 * n_per_class

    key = jax.random.PRNGKey(0)
    kx0, kx1, k1, k2 = jax.random.split(key, 4)

    # Two-class blobs centered at +2 / -2 (independent unit-variance noise).
    x0 = 2.0 + jax.random.normal(kx0, (n_per_class, n_feature), jnp.float32)
    x1 = -2.0 + jax.random.normal(kx1, (n_per_class, n_feature), jnp.float32)
    x = jnp.concatenate([x0, x1], axis=0)

    w1, b1 = init_linear(k1, n_feature, n_hidden)
    w2, b2 = init_linear(k2, n_hidden, n_output)

    out = net_forward(x, w1, b1, w2, b2)
    jax.block_until_ready(out)

    # Pure-JAX f32 reference (kernel is f32 end-to-end now).
    ref = jnp.maximum(x @ w1 + b1, 0.0) @ w2 + b2

    assert out.shape == (batch, n_output)
    assert jnp.allclose(out, ref, atol=1e-4, rtol=1e-4)

    print("KERNEL_OK")
</pallas_src>

<mosaic_0001>
module attributes {stable_mosaic.version = 11 : i64} {
  func.func @_mlp_kernel(%arg0: i32, %arg1: memref<200x2xf32, #tpu.memory_space<vmem>>, %arg2: memref<2x32xf32, #tpu.memory_space<vmem>>, %arg3: memref<1x32xf32, #tpu.memory_space<vmem>>, %arg4: memref<32x2xf32, #tpu.memory_space<vmem>>, %arg5: memref<1x2xf32, #tpu.memory_space<vmem>>, %arg6: memref<200x2xf32, #tpu.memory_space<vmem>>) attributes {dimension_semantics = [#tpu.dimension_semantics<parallel>], iteration_bounds = array<i64: 1>, scalar_prefetch = 0 : i64, scratch_operands = 0 : i64, tpu.core_type = #tpu.core_type<tc>, window_params = [{transform_indices = @transform_0, window_bounds = array<i64: 200, 2>}, {pipeline_mode = #tpu.pipeline_mode<synchronous>, transform_indices = @transform_1, window_bounds = array<i64: 2, 32>}, {pipeline_mode = #tpu.pipeline_mode<synchronous>, transform_indices = @transform_2, window_bounds = array<i64: 1, 32>}, {pipeline_mode = #tpu.pipeline_mode<synchronous>, transform_indices = @transform_3, window_bounds = array<i64: 32, 2>}, {pipeline_mode = #tpu.pipeline_mode<synchronous>, transform_indices = @transform_4, window_bounds = array<i64: 1, 2>}, {transform_indices = @transform_5, window_bounds = array<i64: 200, 2>}]} {
    %c0 = arith.constant 0 : index
    %c0_0 = arith.constant 0 : index
    %0 = vector.load %arg1[%c0, %c0_0] : memref<200x2xf32, #tpu.memory_space<vmem>>, vector<200x2xf32>
    %c0_1 = arith.constant 0 : index
    %c0_2 = arith.constant 0 : index
    %1 = vector.load %arg2[%c0_1, %c0_2] : memref<2x32xf32, #tpu.memory_space<vmem>>, vector<2x32xf32>
    %c0_3 = arith.constant 0 : index
    %c0_4 = arith.constant 0 : index
    %2 = vector.load %arg3[%c0_3, %c0_4] : memref<1x32xf32, #tpu.memory_space<vmem>>, vector<1x32xf32>
    %3 = vector.extract_strided_slice %0 {offsets = [0, 0], sizes = [200, 1], strides = [1, 1]} : vector<200x2xf32> to vector<200x1xf32>
    %4 = vector.extract_strided_slice %1 {offsets = [0, 0], sizes = [1, 32], strides = [1, 1]} : vector<2x32xf32> to vector<1x32xf32>
    %5 = vector.broadcast %3 : vector<200x1xf32> to vector<200x32xf32>
    %6 = vector.broadcast %4 : vector<1x32xf32> to vector<200x32xf32>
    %7 = arith.mulf %5, %6 : vector<200x32xf32>
    %8 = vector.broadcast %2 : vector<1x32xf32> to vector<200x32xf32>
    %9 = arith.addf %8, %7 : vector<200x32xf32>
    %10 = vector.extract_strided_slice %0 {offsets = [0, 1], sizes = [200, 1], strides = [1, 1]} : vector<200x2xf32> to vector<200x1xf32>
    %11 = vector.extract_strided_slice %1 {offsets = [1, 0], sizes = [1, 32], strides = [1, 1]} : vector<2x32xf32> to vector<1x32xf32>
    %12 = vector.broadcast %10 : vector<200x1xf32> to vector<200x32xf32>
    %13 = vector.broadcast %11 : vector<1x32xf32> to vector<200x32xf32>
    %14 = arith.mulf %12, %13 : vector<200x32xf32>
    %15 = arith.addf %9, %14 : vector<200x32xf32>
    %cst = arith.constant 0.000000e+00 : f32
    %16 = vector.broadcast %cst : f32 to vector<200x32xf32>
    %17 = arith.maximumf %15, %16 : vector<200x32xf32>
    %c0_5 = arith.constant 0 : index
    %c0_6 = arith.constant 0 : index
    %18 = vector.load %arg4[%c0_5, %c0_6] : memref<32x2xf32, #tpu.memory_space<vmem>>, vector<32x2xf32>
    %cst_7 = arith.constant dense<0.000000e+00> : vector<200x2xf32>
    %19 = tpu.matmul %17, %18, %cst_7 {dimension_numbers = #tpu.dot_dimension_numbers<[1], [0], [0], [1], [0, 0, 1, 1], [], []>} : vector<200x32xf32>, vector<32x2xf32>, vector<200x2xf32> -> vector<200x2xf32>
    %c0_8 = arith.constant 0 : index
    %c0_9 = arith.constant 0 : index
    %20 = vector.load %arg5[%c0_8, %c0_9] : memref<1x2xf32, #tpu.memory_space<vmem>>, vector<1x2xf32>
    %21 = vector.broadcast %20 : vector<1x2xf32> to vector<200x2xf32>
    %22 = arith.addf %19, %21 : vector<200x2xf32>
    %c0_10 = arith.constant 0 : index
    %c0_11 = arith.constant 0 : index
    %23 = vector.load %arg6[%c0_10, %c0_11] : memref<200x2xf32, #tpu.memory_space<vmem>>, vector<200x2xf32>
    tpu.vector_store %arg6[%c0_10, %c0_11], %22 {strides = array<i32>} : memref<200x2xf32, #tpu.memory_space<vmem>>, vector<200x2xf32>,
    return
  }
  func.func @transform_0(%arg0: i32) -> (i32, i32) {
    %c0_i32 = arith.constant 0 : i32
    %c0_i32_0 = arith.constant 0 : i32
    return %arg0, %c0_i32 : i32, i32
  }
  func.func @transform_1(%arg0: i32) -> (i32, i32) {
    %c0_i32 = arith.constant 0 : i32
    %c0_i32_0 = arith.constant 0 : i32
    %c0_i32_1 = arith.constant 0 : i32
    return %c0_i32, %c0_i32_0 : i32, i32
  }
  func.func @transform_2(%arg0: i32) -> (i32, i32) {
    %c0_i32 = arith.constant 0 : i32
    %c0_i32_0 = arith.constant 0 : i32
    %c0_i32_1 = arith.constant 0 : i32
    return %c0_i32, %c0_i32_0 : i32, i32
  }
  func.func @transform_3(%arg0: i32) -> (i32, i32) {
    %c0_i32 = arith.constant 0 : i32
    %c0_i32_0 = arith.constant 0 : i32
    %c0_i32_1 = arith.constant 0 : i32
    return %c0_i32, %c0_i32_0 : i32, i32
  }
  func.func @transform_4(%arg0: i32) -> (i32, i32) {
    %c0_i32 = arith.constant 0 : i32
    %c0_i32_0 = arith.constant 0 : i32
    %c0_i32_1 = arith.constant 0 : i32
    return %c0_i32, %c0_i32_0 : i32, i32
  }
  func.func @transform_5(%arg0: i32) -> (i32, i32) {
    %c0_i32 = arith.constant 0 : i32
    %c0_i32_0 = arith.constant 0 : i32
    return %arg0, %c0_i32 : i32, i32
  }
}

</mosaic_0001>

<llo_original>
// kernel: net_forward.1
$region0: #{net_forward.1}
  #allocation0 [shape = 'u32[]', space=smem, size = 0x4, offset = 0x4, fixed_abs, tag = 'smem constant byte address 0x4 - core index']
  #allocation1 [shape = 'u32[144,128]{1,0:T(1,128)}', space=vmem, size = 0x12000, scoped, tag = 'internal scratch']
  %s0 = inlined_call_operand.vmem [shape: f32[200,2], index: 0, kind: input, shape index: {}]
  %s1 = inlined_call_operand.vmem [shape: f32[2,32], index: 1, kind: input, shape index: {}]
  %s2 = inlined_call_operand.vmem [shape: f32[1,32], index: 2, kind: input, shape index: {}]
  %s3 = inlined_call_operand.vmem [shape: f32[32,2], index: 3, kind: input, shape index: {}]
  %s4 = inlined_call_operand.vmem [shape: f32[1,2], index: 4, kind: input, shape index: {}]
  %s5 = inlined_call_operand.vmem [shape: f32[200,2], index: 5, kind: output, shape index: {}]
  %s6 = sld [smem:[#allocation0]]
  $region30: #{net_forward.1} parent=0
    _
  %s8 = ssub.s32 1, %s6
  %s9 = scalar_select 0, %s8, %s6
  // Predicated region
  $region2: #{net_forward.1} parent=0 // pred_check
    _
  $region3: #{net_forward.1} parent=0 // pred_check_branch
    %11 = sbr.rel (0) target = $region5
  $region4: #{net_forward.1} parent=0 // pred_region
    _
  $region5: #{net_forward.1} parent=0 // pred_fallthru
    _
  // Predicated region
  $region6: #{net_forward.1} parent=0 // pred_check
    _
  $region7: #{net_forward.1} parent=0 // pred_check_branch
    %13 = sbr.rel (0) target = $region9
  $region8: #{net_forward.1} parent=0 // pred_region
    _
  $region9: #{net_forward.1} parent=0 // pred_fallthru
    _
  // Predicated region
  $region10: #{net_forward.1} parent=0 // pred_check
    _
  $region11: #{net_forward.1} parent=0 // pred_check_branch
    %15 = sbr.rel (0) target = $region13
  $region12: #{net_forward.1} parent=0 // pred_region
    _
  $region13: #{net_forward.1} parent=0 // pred_fallthru
    _
  // Predicated region
  $region14: #{net_forward.1} parent=0 // pred_check
    _
  $region15: #{net_forward.1} parent=0 // pred_check_branch
    %17 = sbr.rel (0) target = $region17
  $region16: #{net_forward.1} parent=0 // pred_region
    _
  $region17: #{net_forward.1} parent=0 // pred_fallthru
    _
  // Predicated region
  $region18: #{net_forward.1} parent=0 // pred_check
    _
  $region19: #{net_forward.1} parent=0 // pred_check_branch
    %19 = sbr.rel (0) target = $region21
  $region20: #{net_forward.1} parent=0 // pred_region
    _
  $region21: #{net_forward.1} parent=0 // pred_fallthru
    _
  %v20 = vld [vmem:[%s0] sm:$0xff]
  %v21 = vld [vmem:[%s0 + $0x8] sm:$0xff]
  %v22 = vld [vmem:[%s0 + $0x10] sm:$0xff]
  %v23 = vld [vmem:[%s0 + $0x18] sm:$0xff]
  %v24 = vld [vmem:[%s0 + $0x20] sm:$0xff]
  %v25 = vld [vmem:[%s0 + $0x28] sm:$0xff]
  %v26 = vld [vmem:[%s0 + $0x30] sm:$0xff]
  %v27 = vld [vmem:[%s0 + $0x38] sm:$0xff]
  %v28 = vld [vmem:[%s0 + $0x40] sm:$0xff]
  %v29 = vld [vmem:[%s0 + $0x48] sm:$0xff]
  %v30 = vld [vmem:[%s0 + $0x50] sm:$0xff]
  %v31 = vld [vmem:[%s0 + $0x58] sm:$0xff]
  %v32 = vld [vmem:[%s0 + $0x60] sm:$0xff]
  %v33 = vld [vmem:[%s0 + $0x68] sm:$0xff]
  %v34 = vld [vmem:[%s0 + $0x70] sm:$0xff]
  %v35 = vld [vmem:[%s0 + $0x78] sm:$0xff]
  %v36 = vld [vmem:[%s0 + $0x80] sm:$0xff]
  %v37 = vld [vmem:[%s0 + $0x88] sm:$0xff]
  %v38 = vld [vmem:[%s0 + $0x90] sm:$0xff]
  %v39 = vld [vmem:[%s0 + $0x98] sm:$0xff]
  %v40 = vld [vmem:[%s0 + $0xa0] sm:$0xff]
  %v41 = vld [vmem:[%s0 + $0xa8] sm:$0xff]
  %v42 = vld [vmem:[%s0 + $0xb0] sm:$0xff]
  %v43 = vld [vmem:[%s0 + $0xb8] sm:$0xff]
  %v44 = vld [vmem:[%s0 + $0xc0] sm:$0xff]
  %v45 = vld [vmem:[%s1] sm:$0x3]
  %v46 = vld [vmem:[%s2] sm:$0x1]
  %48 = vset.pattern.permute.xlu0 0
  %49 = vperm.xlu0 %48, %v20
  %v50 = vpop.permute.xlu0 %49
  %53 = vset.pattern.permute.xlu0 0
  %54 = vperm.xlu0 %53, %v21
  %v55 = vpop.permute.xlu0 %54
  %58 = vset.pattern.permute.xlu0 0
  %59 = vperm.xlu0 %58, %v22
  %v60 = vpop.permute.xlu0 %59
  %63 = vset.pattern.permute.xlu0 0
  %64 = vperm.xlu0 %63, %v23
  %v65 = vpop.permute.xlu0 %64
  %68 = vset.pattern.permute.xlu0 0
  %69 = vperm.xlu0 %68, %v24
  %v70 = vpop.permute.xlu0 %69
  %73 = vset.pattern.permute.xlu0 0
  %74 = vperm.xlu0 %73, %v25
  %v75 = vpop.permute.xlu0 %74
  %78 = vset.pattern.permute.xlu0 0
  %79 = vperm.xlu0 %78, %v26
  %v80 = vpop.permute.xlu0 %79
  %83 = vset.pattern.permute.xlu0 0
  %84 = vperm.xlu0 %83, %v27
  %v85 = vpop.permute.xlu0 %84
  %88 = vset.pattern.permute.xlu0 0
  %89 = vperm.xlu0 %88, %v28
  %v90 = vpop.permute.xlu0 %89
  %93 = vset.pattern.permute.xlu0 0
  %94 = vperm.xlu0 %93, %v29
  %v95 = vpop.permute.xlu0 %94
  %98 = vset.pattern.permute.xlu0 0
  %99 = vperm.xlu0 %98, %v30
  %v100 = vpop.permute.xlu0 %99
  %103 = vset.pattern.permute.xlu0 0
  %104 = vperm.xlu0 %103, %v31
  %v105 = vpop.permute.xlu0 %104
  %108 = vset.pattern.permute.xlu0 0
  %109 = vperm.xlu0 %108, %v32
  %v110 = vpop.permute.xlu0 %109
  %113 = vset.pattern.permute.xlu0 0
  %114 = vperm.xlu0 %113, %v33
  %v115 = vpop.permute.xlu0 %114
  %118 = vset.pattern.permute.xlu0 0
  %119 = vperm.xlu0 %118, %v34
  %v120 = vpop.permute.xlu0 %119
  %123 = vset.pattern.permute.xlu0 0
  %124 = vperm.xlu0 %123, %v35
  %v125 = vpop.permute.xlu0 %124
  %128 = vset.pattern.permute.xlu0 0
  %129 = vperm.xlu0 %128, %v36
  %v130 = vpop.permute.xlu0 %129
  %133 = vset.pattern.permute.xlu0 0
  %134 = vperm.xlu0 %133, %v37
  %v135 = vpop.permute.xlu0 %134
  %138 = vset.pattern.permute.xlu0 0
  %139 = vperm.xlu0 %138, %v38
  %v140 = vpop.permute.xlu0 %139
  %143 = vset.pattern.permute.xlu0 0
  %144 = vperm.xlu0 %143, %v39
  %v145 = vpop.permute.xlu0 %144
  %148 = vset.pattern.permute.xlu0 0
  %149 = vperm.xlu0 %148, %v40
  %v150 = vpop.permute.xlu0 %149
  %153 = vset.pattern.permute.xlu0 0
  %154 = vperm.xlu0 %153, %v41
  %v155 = vpop.permute.xlu0 %154
  %158 = vset.pattern.permute.xlu0 0
  %159 = vperm.xlu0 %158, %v42
  %v160 = vpop.permute.xlu0 %159
  %163 = vset.pattern.permute.xlu0 0
  %164 = vperm.xlu0 %163, %v43
  %v165 = vpop.permute.xlu0 %164
  %168 = vset.pattern.permute.xlu0 0
  %169 = vperm.xlu0 %168, %v44
  %v170 = vpop.permute.xlu0 %169
  %v172 = vlaneseq
  %v173 = vshrl.u32 %v172, 7
  %v174 = vsub.s32 0, %v173
  %v175 = vrot.slane %v45, %v174
  %v176 = vmul.f32 %v50, %v175
  %v177 = vmul.f32 %v55, %v175
  %v178 = vmul.f32 %v60, %v175
  %v179 = vmul.f32 %v65, %v175
  %v180 = vmul.f32 %v70, %v175
  %v181 = vmul.f32 %v75, %v175
  %v182 = vmul.f32 %v80, %v175
  %v183 = vmul.f32 %v85, %v175
  %v184 = vmul.f32 %v90, %v175
  %v185 = vmul.f32 %v95, %v175
  %v186 = vmul.f32 %v100, %v175
  %v187 = vmul.f32 %v105, %v175
  %v188 = vmul.f32 %v110, %v175
  %v189 = vmul.f32 %v115, %v175
  %v190 = vmul.f32 %v120, %v175
  %v191 = vmul.f32 %v125, %v175
  %v192 = vmul.f32 %v130, %v175
  %v193 = vmul.f32 %v135, %v175
  %v194 = vmul.f32 %v140, %v175
  %v195 = vmul.f32 %v145, %v175
  %v196 = vmul.f32 %v150, %v175
  %v197 = vmul.f32 %v155, %v175
  %v198 = vmul.f32 %v160, %v175
  %v199 = vmul.f32 %v165, %v175
  %v200 = vmul.f32 %v170, %v175
  %v202 = vlaneseq
  %v203 = vshrl.u32 %v202, 7
  %v204 = vsub.s32 0, %v203
  %v205 = vrot.slane %v46, %v204
  %v207 = vadd.f32 %v205, %v176
  %v208 = vadd.f32 %v205, %v177
  %v209 = vadd.f32 %v205, %v178
  %v210 = vadd.f32 %v205, %v179
  %v211 = vadd.f32 %v205, %v180
  %v212 = vadd.f32 %v205, %v181
  %v213 = vadd.f32 %v205, %v182
  %v214 = vadd.f32 %v205, %v183
  %v215 = vadd.f32 %v205, %v184
  %v216 = vadd.f32 %v205, %v185
  %v217 = vadd.f32 %v205, %v186
  %v218 = vadd.f32 %v205, %v187
  %v219 = vadd.f32 %v205, %v188
  %v220 = vadd.f32 %v205, %v189
  %v221 = vadd.f32 %v205, %v190
  %v222 = vadd.f32 %v205, %v191
  %v223 = vadd.f32 %v205, %v192
  %v224 = vadd.f32 %v205, %v193
  %v225 = vadd.f32 %v205, %v194
  %v226 = vadd.f32 %v205, %v195
  %v227 = vadd.f32 %v205, %v196
  %v228 = vadd.f32 %v205, %v197
  %v229 = vadd.f32 %v205, %v198
  %v230 = vadd.f32 %v205, %v199
  %v231 = vadd.f32 %v205, %v200
  %232 = vset.pattern.permute.xlu0 1
  %233 = vperm.xlu0 %232, %v20
  %v234 = vpop.permute.xlu0 %233
  %236 = vset.pattern.permute.xlu0 1
  %237 = vperm.xlu0 %236, %v21
  %v238 = vpop.permute.xlu0 %237
  %240 = vset.pattern.permute.xlu0 1
  %241 = vperm.xlu0 %240, %v22
  %v242 = vpop.permute.xlu0 %241
  %244 = vset.pattern.permute.xlu0 1
  %245 = vperm.xlu0 %244, %v23
  %v246 = vpop.permute.xlu0 %245
  %248 = vset.pattern.permute.xlu0 1
  %249 = vperm.xlu0 %248, %v24
  %v250 = vpop.permute.xlu0 %249
  %252 = vset.pattern.permute.xlu0 1
  %253 = vperm.xlu0 %252, %v25
  %v254 = vpop.permute.xlu0 %253
  %256 = vset.pattern.permute.xlu0 1
  %257 = vperm.xlu0 %256, %v26
  %v258 = vpop.permute.xlu0 %257
  %260 = vset.pattern.permute.xlu0 1
  %261 = vperm.xlu0 %260, %v27
  %v262 = vpop.permute.xlu0 %261
  %264 = vset.pattern.permute.xlu0 1
  %265 = vperm.xlu0 %264, %v28
  %v266 = vpop.permute.xlu0 %265
  %268 = vset.pattern.permute.xlu0 1
  %269 = vperm.xlu0 %268, %v29
  %v270 = vpop.permute.xlu0 %269
  %272 = vset.pattern.permute.xlu0 1
  %273 = vperm.xlu0 %272, %v30
  %v274 = vpop.permute.xlu0 %273
  %276 = vset.pattern.permute.xlu0 1
  %277 = vperm.xlu0 %276, %v31
  %v278 = vpop.permute.xlu0 %277
  %280 = vset.pattern.permute.xlu0 1
  %281 = vperm.xlu0 %280, %v32
  %v282 = vpop.permute.xlu0 %281
  %284 = vset.pattern.permute.xlu0 1
  %285 = vperm.xlu0 %284, %v33
  %v286 = vpop.permute.xlu0 %285
  %288 = vset.pattern.permute.xlu0 1
  %289 = vperm.xlu0 %288, %v34
  %v290 = vpop.permute.xlu0 %289
  %292 = vset.pattern.permute.xlu0 1
  %293 = vperm.xlu0 %292, %v35
  %v294 = vpop.permute.xlu0 %293
  %296 = vset.pattern.permute.xlu0 1
  %297 = vperm.xlu0 %296, %v36
  %v298 = vpop.permute.xlu0 %297
  %300 = vset.pattern.permute.xlu0 1
  %301 = vperm.xlu0 %300, %v37
  %v302 = vpop.permute.xlu0 %301
  %304 = vset.pattern.permute.xlu0 1
  %305 = vperm.xlu0 %304, %v38
  %v306 = vpop.permute.xlu0 %305
  %308 = vset.pattern.permute.xlu0 1
  %309 = vperm.xlu0 %308, %v39
  %v310 = vpop.permute.xlu0 %309
  %312 = vset.pattern.permute.xlu0 1
  %313 = vperm.xlu0 %312, %v40
  %v314 = vpop.permute.xlu0 %313
  %316 = vset.pattern.permute.xlu0 1
  %317 = vperm.xlu0 %316, %v41
  %v318 = vpop.permute.xlu0 %317
  %320 = vset.pattern.permute.xlu0 1
  %321 = vperm.xlu0 %320, %v42
  %v322 = vpop.permute.xlu0 %321
  %324 = vset.pattern.permute.xlu0 1
  %325 = vperm.xlu0 %324, %v43
  %v326 = vpop.permute.xlu0 %325
  %328 = vset.pattern.permute.xlu0 1
  %329 = vperm.xlu0 %328, %v44
  %v330 = vpop.permute.xlu0 %329
  %v332 = vlaneseq
  %v333 = vshrl.u32 %v332, 7
  %v334 = vsub.s32 1, %v333
  %v335 = vrot.slane %v45, %v334
  %v336 = vmul.f32 %v234, %v335
  %v337 = vmul.f32 %v238, %v335
  %v338 = vmul.f32 %v242, %v335
  %v339 = vmul.f32 %v246, %v335
  %v340 = vmul.f32 %v250, %v335
  %v341 = vmul.f32 %v254, %v335
  %v342 = vmul.f32 %v258, %v335
  %v343 = vmul.f32 %v262, %v335
  %v344 = vmul.f32 %v266, %v335
  %v345 = vmul.f32 %v270, %v335
  %v346 = vmul.f32 %v274, %v335
  %v347 = vmul.f32 %v278, %v335
  %v348 = vmul.f32 %v282, %v335
  %v349 = vmul.f32 %v286, %v335
  %v350 = vmul.f32 %v290, %v335
  %v351 = vmul.f32 %v294, %v335
  %v352 = vmul.f32 %v298, %v335
  %v353 = vmul.f32 %v302, %v335
  %v354 = vmul.f32 %v306, %v335
  %v355 = vmul.f32 %v310, %v335
  %v356 = vmul.f32 %v314, %v335
  %v357 = vmul.f32 %v318, %v335
  %v358 = vmul.f32 %v322, %v335
  %v359 = vmul.f32 %v326, %v335
  %v360 = vmul.f32 %v330, %v335
  %v361 = vadd.f32 %v207, %v336
  %v362 = vadd.f32 %v208, %v337
  %v363 = vadd.f32 %v209, %v338
  %v364 = vadd.f32 %v210, %v339
  %v365 = vadd.f32 %v211, %v340
  %v366 = vadd.f32 %v212, %v341
  %v367 = vadd.f32 %v213, %v342
  %v368 = vadd.f32 %v214, %v343
  %v369 = vadd.f32 %v215, %v344
  %v370 = vadd.f32 %v216, %v345
  %v371 = vadd.f32 %v217, %v346
  %v372 = vadd.f32 %v218, %v347
  %v373 = vadd.f32 %v219, %v348
  %v374 = vadd.f32 %v220, %v349
  %v375 = vadd.f32 %v221, %v350
  %v376 = vadd.f32 %v222, %v351
  %v377 = vadd.f32 %v223, %v352
  %v378 = vadd.f32 %v224, %v353
  %v379 = vadd.f32 %v225, %v354
  %v380 = vadd.f32 %v226, %v355
  %v381 = vadd.f32 %v227, %v356
  %v382 = vadd.f32 %v228, %v357
  %v383 = vadd.f32 %v229, %v358
  %v384 = vadd.f32 %v230, %v359
  %v385 = vadd.f32 %v231, %v360
  %v386 = vmax.f32 %v361, 0.0
  %v387 = vmax.f32 %v362, 0.0
  %v388 = vmax.f32 %v363, 0.0
  %v389 = vmax.f32 %v364, 0.0
  %v390 = vmax.f32 %v365, 0.0
  %v391 = vmax.f32 %v366, 0.0
  %v392 = vmax.f32 %v367, 0.0
  %v393 = vmax.f32 %v368, 0.0
  %v394 = vmax.f32 %v369, 0.0
  %v395 = vmax.f32 %v370, 0.0
  %v396 = vmax.f32 %v371, 0.0
  %v397 = vmax.f32 %v372, 0.0
  %v398 = vmax.f32 %v373, 0.0
  %v399 = vmax.f32 %v374, 0.0
  %v400 = vmax.f32 %v375, 0.0
  %v401 = vmax.f32 %v376, 0.0
  %v402 = vmax.f32 %v377, 0.0
  %v403 = vmax.f32 %v378, 0.0
  %v404 = vmax.f32 %v379, 0.0
  %v405 = vmax.f32 %v380, 0.0
  %v406 = vmax.f32 %v381, 0.0
  %v407 = vmax.f32 %v382, 0.0
  %v408 = vmax.f32 %v383, 0.0
  %v409 = vmax.f32 %v384, 0.0
  %v410 = vmax.f32 %v385, 0.0
  %v411 = vld [vmem:[%s3] sm:$0xff]
  %v412 = vld [vmem:[%s3 + $0x8] sm:$0xff]
  %v413 = vld [vmem:[%s3 + $0x10] sm:$0xff]
  %v414 = vld [vmem:[%s3 + $0x18] sm:$0xff]
  %v415 = vld [vmem:[%s4] sm:$0x1]
  %v417 = vlaneseq
  %v418 = vshrl.u32 %v417, 7
  %v419 = vsub.s32 0, %v418
  %v420 = vrot.slane %v415, %v419
  %vm422 = vcmask 261120
  %v424 = vsel %vm422, %v386, 0
  %v427 = vsel %vm422, %v387, 0
  %v430 = vsel %vm422, %v388, 0
  %v433 = vsel %vm422, %v389, 0
  %v436 = vsel %vm422, %v390, 0
  %v439 = vsel %vm422, %v391, 0
  %v442 = vsel %vm422, %v392, 0
  %v445 = vsel %vm422, %v393, 0
  %v448 = vsel %vm422, %v394, 0
  %v451 = vsel %vm422, %v395, 0
  %v454 = vsel %vm422, %v396, 0
  %v457 = vsel %vm422, %v397, 0
  %v460 = vsel %vm422, %v398, 0
  %v463 = vsel %vm422, %v399, 0
  %v466 = vsel %vm422, %v400, 0
  %v469 = vsel %vm422, %v401, 0
  %v472 = vsel %vm422, %v402, 0
  %v475 = vsel %vm422, %v403, 0
  %v478 = vsel %vm422, %v404, 0
  %v481 = vsel %vm422, %v405, 0
  %v484 = vsel %vm422, %v406, 0
  %v487 = vsel %vm422, %v407, 0
  %v490 = vsel %vm422, %v408, 0
  %v493 = vsel %vm422, %v409, 0
  %v496 = vsel %vm422, %v410, 0
  %498 = vmatprep.subr.mxu0 0.0
  %499 = vmatpush1.msra.mxu0 %v411
  %500 = vmatprep.subr.mxu0 0.0
  %501 = vmatpush1.msra.mxu0 %v412
  %502 = vmatprep.subr.mxu0 0.0
  %503 = vmatpush1.msra.mxu0 %v413
  %504 = vmatprep.subr.mxu0 0.0
  %505 = vmatpush1.msra.mxu0 %v414
  %506 = vmatprep.subr.mxu0 0.0
  %507 = vmatpush1.msra.mxu0 0.0
  %508 = vmatprep.subr.mxu0 0.0
  %509 = vmatpush1.msra.mxu0 0.0
  %510 = vmatprep.subr.mxu0 0.0
  %511 = vmatpush1.msra.mxu0 0.0
  %512 = vmatprep.subr.mxu0 0.0
  %513 = vmatpush1.msra.mxu0 0.0
  %514 = vmatprep.subr.mxu0 0.0
  %515 = vmatpush1.msra.mxu0 0.0
  %516 = vmatprep.subr.mxu0 0.0
  %517 = vmatpush1.msra.mxu0 0.0
  %518 = vmatprep.subr.mxu0 0.0
  %519 = vmatpush1.msra.mxu0 0.0
  %520 = vmatprep.subr.mxu0 0.0
  %521 = vmatpush1.msra.mxu0 0.0
  %522 = vmatprep.subr.mxu0 0.0
  %523 = vmatpush1.msra.mxu0 0.0
  %524 = vmatprep.subr.mxu0 0.0
  %525 = vmatpush1.msra.mxu0 0.0
  %526 = vmatprep.subr.mxu0 0.0
  %527 = vmatpush1.msra.mxu0 0.0
  %528 = vmatprep.subr.mxu0 0.0
  %529 = vmatpush1.msra.mxu0 0.0
  %530 = vmatprep.subr.mxu0 0.0
  %531 = vmatpush1.msra.mxu0 0.0
  %532 = vmatprep.subr.mxu0 0.0
  %533 = vmatpush1.msra.mxu0 0.0
  %534 = vmatprep.subr.mxu0 0.0
  %535 = vmatpush1.msra.mxu0 0.0
  %536 = vmatprep.subr.mxu0 0.0
  %537 = vmatpush1.msra.mxu0 0.0
  %538 = vmatprep.subr.mxu0 0.0
  %539 = vmatpush1.msra.mxu0 0.0
  %540 = vmatprep.subr.mxu0 0.0
  %541 = vmatpush1.msra.mxu0 0.0
  %542 = vmatprep.subr.mxu0 0.0
  %543 = vmatpush1.msra.mxu0 0.0
  %544 = vmatprep.subr.mxu0 0.0
  %545 = vmatpush1.msra.mxu0 0.0
  %546 = vmatprep.subr.mxu0 0.0
  %547 = vmatpush1.msra.mxu0 0.0
  %548 = vmatprep.subr.mxu0 0.0
  %549 = vmatpush1.msra.mxu0 0.0
  %550 = vmatprep.subr.mxu0 0.0
  %551 = vmatpush1.msra.mxu0 0.0
  %552 = vmatprep.subr.mxu0 0.0
  %553 = vmatpush1.msra.mxu0 0.0
  %554 = vmatprep.subr.mxu0 0.0
  %555 = vmatpush1.msra.mxu0 0.0
  %556 = vmatprep.subr.mxu0 0.0
  %557 = vmatpush1.msra.mxu0 0.0
  %558 = vmatprep.subr.mxu0 0.0
  %559 = vmatpush1.msra.mxu0 0.0
  %560 = vmatprep.subr.mxu0 0.0
  %561 = vmatpush1.msra.mxu0 0.0
  %562 = vmatprep.mubr.f32.mxu0 0.0
  %563 = vmatmul.mubr.f32.gmra.mrb[0].mxu0 %v424
  %v564 = vpop.f32.mrb[0].mxu0
  %v565 = vadd.f32 %v420, %v564
  %v566 = vpop.f32.mrb[0].mxu0
  %567 = vmatprep.mubr.f32.mxu0 0.0
  %568 = vmatmul.mubr.f32.gmra.mrb[0].mxu0 %v427
  %v569 = vpop.f32.mrb[0].mxu0
  %v570 = vadd.f32 %v420, %v569
  %v571 = vpop.f32.mrb[0].mxu0
  %572 = vmatprep.mubr.f32.mxu0 0.0
  %573 = vmatmul.mubr.f32.gmra.mrb[0].mxu0 %v430
  %v574 = vpop.f32.mrb[0].mxu0
  %v575 = vadd.f32 %v420, %v574
  %v576 = vpop.f32.mrb[0].mxu0
  %577 = vmatprep.mubr.f32.mxu0 0.0
  %578 = vmatmul.mubr.f32.gmra.mrb[0].mxu0 %v433
  %v579 = vpop.f32.mrb[0].mxu0
  %v580 = vadd.f32 %v420, %v579
  %v581 = vpop.f32.mrb[0].mxu0
  %582 = vmatprep.mubr.f32.mxu0 0.0
  %583 = vmatmul.mubr.f32.gmra.mrb[0].mxu0 %v436
  %v584 = vpop.f32.mrb[0].mxu0
  %v585 = vadd.f32 %v420, %v584
  %v586 = vpop.f32.mrb[0].mxu0
  %587 = vmatprep.mubr.f32.mxu0 0.0
  %588 = vmatmul.mubr.f32.gmra.mrb[0].mxu0 %v439
  %v589 = vpop.f32.mrb[0].mxu0
  %v590 = vadd.f32 %v420, %v589
  %v591 = vpop.f32.mrb[0].mxu0
  %592 = vmatprep.mubr.f32.mxu0 0.0
  %593 = vmatmul.mubr.f32.gmra.mrb[0].mxu0 %v442
  %v594 = vpop.f32.mrb[0].mxu0
  %v595 = vadd.f32 %v420, %v594
  %v596 = vpop.f32.mrb[0].mxu0
  %597 = vmatprep.mubr.f32.mxu0 0.0
  %598 = vmatmul.mubr.f32.gmra.mrb[0].mxu0 %v445
  %v599 = vpop.f32.mrb[0].mxu0
  %v600 = vadd.f32 %v420, %v599
  %v601 = vpop.f32.mrb[0].mxu0
  %602 = vmatprep.mubr.f32.mxu0 0.0
  %603 = vmatmul.mubr.f32.gmra.mrb[0].mxu0 %v448
  %v604 = vpop.f32.mrb[0].mxu0
  %v605 = vadd.f32 %v420, %v604
  %v606 = vpop.f32.mrb[0].mxu0
  %607 = vmatprep.mubr.f32.mxu0 0.0
  %608 = vmatmul.mubr.f32.gmra.mrb[0].mxu0 %v451
  %v609 = vpop.f32.mrb[0].mxu0
  %v610 = vadd.f32 %v420, %v609
  %v611 = vpop.f32.mrb[0].mxu0
  %612 = vmatprep.mubr.f32.mxu0 0.0
  %613 = vmatmul.mubr.f32.gmra.mrb[0].mxu0 %v454
  %v614 = vpop.f32.mrb[0].mxu0
  %v615 = vadd.f32 %v420, %v614
  %v616 = vpop.f32.mrb[0].mxu0
  %617 = vmatprep.mubr.f32.mxu0 0.0
  %618 = vmatmul.mubr.f32.gmra.mrb[0].mxu0 %v457
  %v619 = vpop.f32.mrb[0].mxu0
  %v620 = vadd.f32 %v420, %v619
  %v621 = vpop.f32.mrb[0].mxu0
  %622 = vmatprep.mubr.f32.mxu0 0.0
  %623 = vmatmul.mubr.f32.gmra.mrb[0].mxu0 %v460
  %v624 = vpop.f32.mrb[0].mxu0
  %v625 = vadd.f32 %v420, %v624
  %v626 = vpop.f32.mrb[0].mxu0
  %627 = vmatprep.mubr.f32.mxu0 0.0
  %628 = vmatmul.mubr.f32.gmra.mrb[0].mxu0 %v463
  %v629 = vpop.f32.mrb[0].mxu0
  %v630 = vadd.f32 %v420, %v629
  %v631 = vpop.f32.mrb[0].mxu0
  %632 = vmatprep.mubr.f32.mxu0 0.0
  %633 = vmatmul.mubr.f32.gmra.mrb[0].mxu0 %v466
  %v634 = vpop.f32.mrb[0].mxu0
  %v635 = vadd.f32 %v420, %v634
  %v636 = vpop.f32.mrb[0].mxu0
  %637 = vmatprep.mubr.f32.mxu0 0.0
  %638 = vmatmul.mubr.f32.gmra.mrb[0].mxu0 %v469
  %v639 = vpop.f32.mrb[0].mxu0
  %v640 = vadd.f32 %v420, %v639
  %v641 = vpop.f32.mrb[0].mxu0
  %642 = vmatprep.mubr.f32.mxu0 0.0
  %643 = vmatmul.mubr.f32.gmra.mrb[0].mxu0 %v472
  %v644 = vpop.f32.mrb[0].mxu0
  %v645 = vadd.f32 %v420, %v644
  %v646 = vpop.f32.mrb[0].mxu0
  %647 = vmatprep.mubr.f32.mxu0 0.0
  %648 = vmatmul.mubr.f32.gmra.mrb[0].mxu0 %v475
  %v649 = vpop.f32.mrb[0].mxu0
  %v650 = vadd.f32 %v420, %v649
  %v651 = vpop.f32.mrb[0].mxu0
  %652 = vmatprep.mubr.f32.mxu0 0.0
  %653 = vmatmul.mubr.f32.gmra.mrb[0].mxu0 %v478
  %v654 = vpop.f32.mrb[0].mxu0
  %v655 = vadd.f32 %v420, %v654
  %v656 = vpop.f32.mrb[0].mxu0
  %657 = vmatprep.mubr.f32.mxu0 0.0
  %658 = vmatmul.mubr.f32.gmra.mrb[0].mxu0 %v481
  %v659 = vpop.f32.mrb[0].mxu0
  %v660 = vadd.f32 %v420, %v659
  %v661 = vpop.f32.mrb[0].mxu0
  %662 = vmatprep.mubr.f32.mxu0 0.0
  %663 = vmatmul.mubr.f32.gmra.mrb[0].mxu0 %v484
  %v664 = vpop.f32.mrb[0].mxu0
  %v665 = vadd.f32 %v420, %v664
  %v666 = vpop.f32.mrb[0].mxu0
  %667 = vmatprep.mubr.f32.mxu0 0.0
  %668 = vmatmul.mubr.f32.gmra.mrb[0].mxu0 %v487
  %v669 = vpop.f32.mrb[0].mxu0
  %v670 = vadd.f32 %v420, %v669
  %v671 = vpop.f32.mrb[0].mxu0
  %672 = vmatprep.mubr.f32.mxu0 0.0
  %673 = vmatmul.mubr.f32.gmra.mrb[0].mxu0 %v490
  %v674 = vpop.f32.mrb[0].mxu0
  %v675 = vadd.f32 %v420, %v674
  %v676 = vpop.f32.mrb[0].mxu0
  %677 = vmatprep.mubr.f32.mxu0 0.0
  %678 = vmatmul.mubr.f32.gmra.mrb[0].mxu0 %v493
  %v679 = vpop.f32.mrb[0].mxu0
  %v680 = vadd.f32 %v420, %v679
  %v681 = vpop.f32.mrb[0].mxu0
  %682 = vmatprep.mubr.f32.mxu0 0.0
  %683 = vmatmul.mubr.f32.gmra.mrb[0].mxu0 %v496
  %v684 = vpop.f32.mrb[0].mxu0
  %v685 = vadd.f32 %v420, %v684
  %v686 = vpop.f32.mrb[0].mxu0
  %687 = vdwg.mxu0
  %vm688 = vcmask 15360
  %689 = vst.msk [vmem:[%s5] sm:$0xff] %vm688, %v565
  %690 = vst.msk [vmem:[%s5 + $0x8] sm:$0xff] %vm688, %v570
  %691 = vst.msk [vmem:[%s5 + $0x10] sm:$0xff] %vm688, %v575
  %692 = vst.msk [vmem:[%s5 + $0x18] sm:$0xff] %vm688, %v580
  %693 = vst.msk [vmem:[%s5 + $0x20] sm:$0xff] %vm688, %v585
  %694 = vst.msk [vmem:[%s5 + $0x28] sm:$0xff] %vm688, %v590
  %695 = vst.msk [vmem:[%s5 + $0x30] sm:$0xff] %vm688, %v595
  %696 = vst.msk [vmem:[%s5 + $0x38] sm:$0xff] %vm688, %v600
  %697 = vst.msk [vmem:[%s5 + $0x40] sm:$0xff] %vm688, %v605
  %698 = vst.msk [vmem:[%s5 + $0x48] sm:$0xff] %vm688, %v610
  %699 = vst.msk [vmem:[%s5 + $0x50] sm:$0xff] %vm688, %v615
  %700 = vst.msk [vmem:[%s5 + $0x58] sm:$0xff] %vm688, %v620
  %701 = vst.msk [vmem:[%s5 + $0x60] sm:$0xff] %vm688, %v625
  %702 = vst.msk [vmem:[%s5 + $0x68] sm:$0xff] %vm688, %v630
  %703 = vst.msk [vmem:[%s5 + $0x70] sm:$0xff] %vm688, %v635
  %704 = vst.msk [vmem:[%s5 + $0x78] sm:$0xff] %vm688, %v640
  %705 = vst.msk [vmem:[%s5 + $0x80] sm:$0xff] %vm688, %v645
  %706 = vst.msk [vmem:[%s5 + $0x88] sm:$0xff] %vm688, %v650
  %707 = vst.msk [vmem:[%s5 + $0x90] sm:$0xff] %vm688, %v655
  %708 = vst.msk [vmem:[%s5 + $0x98] sm:$0xff] %vm688, %v660
  %709 = vst.msk [vmem:[%s5 + $0xa0] sm:$0xff] %vm688, %v665
  %710 = vst.msk [vmem:[%s5 + $0xa8] sm:$0xff] %vm688, %v670
  %711 = vst.msk [vmem:[%s5 + $0xb0] sm:$0xff] %vm688, %v675
  %712 = vst.msk [vmem:[%s5 + $0xb8] sm:$0xff] %vm688, %v680
  %713 = vst.msk [vmem:[%s5 + $0xc0] sm:$0xff] %vm688, %v685
  // Predicated region
  $region22: #{net_forward.1} parent=0 // pred_check
    _
  $region23: #{net_forward.1} parent=0 // pred_check_branch
    %715 = sbr.rel (0) target = $region25
  $region24: #{net_forward.1} parent=0 // pred_region
    _
  $region25: #{net_forward.1} parent=0 // pred_fallthru
    _
  // Predicated region
  $region26: #{net_forward.1} parent=0 // pred_check
    _
  $region27: #{net_forward.1} parent=0 // pred_check_branch
    %717 = sbr.rel (0) target = $region29
  $region28: #{net_forward.1} parent=0 // pred_region
    _
  $region29: #{net_forward.1} parent=0 // pred_fallthru
    _

</llo_original>
